<compile_context>
chip_gen: v7x
topology: tpu7x:2x2x1
jax: 0.10.0
libtpu: 0.0.40
codegen_flags: <defaults>
</compile_context>

<pallas_src>
import jax
import jax.numpy as jnp
import numpy as np
from jax import lax
from jax.experimental import pallas as pl
from jax.experimental.pallas import tpu as pltpu


def _round_up(x, m):
    return ((x + m - 1) // m) * m


def _embedding_kernel(
    ids_ref,                       # (TILE_N, 8) int32: col0=word, col1=age+off, col2=posi+off, col3=seg
    fused_hi_ref, fused_lo_ref,    # (V_total, H) bf16   VMEM-resident fused folded tables (hi / residual)
    seg_tbl_ref,                   # (seg_vocab, H) f32  VMEM-resident
    b_ref, gamma_ref, beta_ref,    # (1, H) f32          VMEM-resident
    out_ref,                       # (TILE_N, H)
):
    tn = ids_ref.shape[0]
    vtot = fused_hi_ref.shape[0]

    ids = ids_ref[...]
    w = ids[:, 0:1]
    a = ids[:, 1:2]
    p = ids[:, 2:3]
    s = ids[:, 3:4]

    # Fused word+age+posi gather as ONE multi-hot matmul on the MXU.  The three vocab
    # regions are disjoint (offsets were added to the ids in the wrapper), so OR-ing the
    # three compares builds a mask whose matmul sums the three folded rows in a single
    # bf16 pass; a second bf16 pass over the residual table restores ~16 mantissa bits.
    # (bf16 shares f32's exponent range, so no pre-scaling of the residual is needed.)
    iota = lax.broadcasted_iota(jnp.int32, (tn, vtot), dimension=1)
    multihot = ((iota == w) | (iota == a) | (iota == p)).astype(jnp.bfloat16)
    hi = jnp.dot(multihot, fused_hi_ref[...], preferred_element_type=jnp.float32)
    lo = jnp.dot(multihot, fused_lo_ref[...], preferred_element_type=jnp.float32)

    # Linear bias folded in here; tanh on the EUP.
    h = jnp.tanh(hi + lo + b_ref[...])

    # Segment embedding: vocab is tiny (2 for CEHR-BERT), so a static chain of VPU
    # selects is far cheaper than a one-hot MXU pass.
    seg_rows = seg_tbl_ref[...]
    seg_emb = jnp.broadcast_to(seg_rows[0:1, :], h.shape)
    for r in range(1, seg_tbl_ref.shape[0]):
        seg_emb = jnp.where(s == r, seg_rows[r:r + 1, :], seg_emb)
    h = h + seg_emb

    # BertLayerNorm (eps=1e-12) over the hidden dim.
    mean = jnp.mean(h, axis=-1, keepdims=True)
    var = jnp.mean((h - mean) ** 2, axis=-1, keepdims=True)
    normed = (h - mean) * lax.rsqrt(var + 1e-12)
    out_ref[...] = (normed * gamma_ref[...] + beta_ref[...]).astype(out_ref.dtype)


def prepare_params(params):
    """Model-load-time precompute.

    * Folds Linear(3H->H) into the word/age/posi tables (gather commutes with a
      right-matmul).
    * Concatenates the three folded tables along the vocab axis (word | age | posi) so the
      kernel performs a single multi-hot matmul; returns the per-table id offsets.
    * Splits the fused table into a bf16 "hi" part and a bf16 residual "lo" part, done
      once here instead of every grid step.
    """
    H = params["word_tbl"].shape[1]
    W = params["W"]  # (H, 3H), torch Linear convention

    word_f = params["word_tbl"] @ W[:, 0 * H:1 * H].T
    age_f = params["age_tbl"] @ W[:, 1 * H:2 * H].T
    posi_f = params["posi_tbl"] @ W[:, 2 * H:3 * H].T

    fused = jnp.concatenate([word_f, age_f, posi_f], axis=0).astype(jnp.float32)
    v_tot = _round_up(fused.shape[0], 8)
    if v_tot != fused.shape[0]:
        fused = jnp.pad(fused, ((0, v_tot - fused.shape[0]), (0, 0)))

    fused_hi = fused.astype(jnp.bfloat16)
    fused_lo = (fused - fused_hi.astype(jnp.float32)).astype(jnp.bfloat16)

    return {
        "fused_hi": fused_hi,
        "fused_lo": fused_lo,
        "seg_tbl": params["seg_tbl"].astype(jnp.float32),
        "b": params["b"].reshape(1, H).astype(jnp.float32),
        "gamma": params["gamma"].reshape(1, H).astype(jnp.float32),
        "beta": params["beta"].reshape(1, H).astype(jnp.float32),
        "age_offset": int(params["word_tbl"].shape[0]),
        "posi_offset": int(params["word_tbl"].shape[0] + params["age_tbl"].shape[0]),
    }


def embedding_forward(word_ids, age_ids, seg_ids, posi_ids, prepared, *,
                      tile_n=512, out_dtype=jnp.float32):
    """prepared: output of prepare_params(). out_dtype=jnp.bfloat16 halves HBM writeback."""
    B, S = word_ids.shape
    H = prepared["fused_hi"].shape[1]
    N = B * S

    # Row-tile size: multiple of 8 sublanes (512 keeps per-step overhead amortized and the
    # MXU M-dim full on v6e/v7x).  Don't over-pad tiny inputs, and keep >= 2 grid steps
    # when possible so the "parallel" row axis can shard across both TensorCores on v7x.
    tile_n = max(8, min(_round_up(tile_n, 8), _round_up(N, 8)))
    if _round_up(N, tile_n) // tile_n < 2 and N > 8:
        tile_n = max(8, _round_up(pl.cdiv(N, 2), 8))
    n_pad = _round_up(N, tile_n)
    grid = (n_pad // tile_n,)

    # Single merged id stream: one (tile_n, 8) block per step instead of four (tile_n, 1)
    # DMAs.  Vocab offsets for the fused table are added here; padded rows are all-zero
    # (they harmlessly select word row 0 and are sliced off below).
    ids = jnp.stack(
        [
            word_ids.reshape(N).astype(jnp.int32),
            age_ids.reshape(N).astype(jnp.int32) + prepared["age_offset"],
            posi_ids.reshape(N).astype(jnp.int32) + prepared["posi_offset"],
            seg_ids.reshape(N).astype(jnp.int32),
        ],
        axis=-1,
    )                                                              # (N, 4)
    ids = jnp.pad(ids, ((0, n_pad - N), (0, 8 - ids.shape[1])))    # (n_pad, 8)

    def resident(arr):
        # Whole array stays VMEM-resident across grid steps (constant index map).
        return pl.BlockSpec(arr.shape, lambda i: (0, 0))

    out = pl.pallas_call(
        _embedding_kernel,
        out_shape=jax.ShapeDtypeStruct((n_pad, H), out_dtype),
        grid=grid,
        in_specs=[
            pl.BlockSpec((tile_n, 8), lambda i: (i, 0)),
            resident(prepared["fused_hi"]), resident(prepared["fused_lo"]),
            resident(prepared["seg_tbl"]),
            resident(prepared["b"]), resident(prepared["gamma"]), resident(prepared["beta"]),
        ],
        out_specs=pl.BlockSpec((tile_n, H), lambda i: (i, 0)),
        compiler_params=pltpu.CompilerParams(
            dimension_semantics=("parallel",),          # shards rows across TCs on v7x
            # 48 MiB is safe on v7x (64 MiB physical) and raises v5e's 16 MiB scoped
            # default so large folded tables can stay resident on v5e/v6e.
            vmem_limit_bytes=48 * 1024 * 1024,
        ),
    )(
        ids,
        prepared["fused_hi"], prepared["fused_lo"], prepared["seg_tbl"],
        prepared["b"], prepared["gamma"], prepared["beta"],
    )
    return out[:N].reshape(B, S, H)


def init_posi_embedding(max_position_embedding, hidden_size):
    """Mirror of the PyTorch _init_posi_embedding (sin on even idx, cos on odd idx)."""
    lookup = np.zeros((max_position_embedding, hidden_size), dtype=np.float32)
    pos = np.arange(max_position_embedding, dtype=np.float32)[:, None]
    even_idx = np.arange(0, hidden_size, 2, dtype=np.float32)[None, :]
    odd_idx = np.arange(1, hidden_size, 2, dtype=np.float32)[None, :]
    lookup[:, 0::2] = np.sin(pos / np.power(10000.0, 2.0 * even_idx / hidden_size))
    lookup[:, 1::2] = np.cos(pos / np.power(10000.0, 2.0 * odd_idx / hidden_size))
    return jnp.asarray(lookup)


def make_params(key, vocab_size, seg_vocab_size, age_vocab_size, max_seq_length, hidden):
    ks = jax.random.split(key, 6)
    return {
        "word_tbl": 0.02 * jax.random.normal(ks[0], (vocab_size, hidden), jnp.float32),
        "seg_tbl": 0.02 * jax.random.normal(ks[1], (seg_vocab_size, hidden), jnp.float32),
        "age_tbl": 0.02 * jax.random.normal(ks[2], (age_vocab_size, hidden), jnp.float32),
        "posi_tbl": init_posi_embedding(max_seq_length, hidden),
        # torch Linear(in=3H, out=H): W [H, 3H], b [H]
        "W": jax.random.uniform(ks[3], (hidden, 3 * hidden), jnp.float32,
                                -1.0 / np.sqrt(3 * hidden), 1.0 / np.sqrt(3 * hidden)),
        "b": jax.random.uniform(ks[4], (hidden,), jnp.float32,
                                -1.0 / np.sqrt(3 * hidden), 1.0 / np.sqrt(3 * hidden)),
        "gamma": jnp.ones((hidden,), jnp.float32),
        "beta": jnp.zeros((hidden,), jnp.float32),
    }


def _reference(word_ids, age_ids, seg_ids, posi_ids, params):
    """Plain-JAX reference of the same forward pass (sanity check)."""
    we = jnp.take(params["word_tbl"], word_ids, axis=0)
    ae = jnp.take(params["age_tbl"], age_ids, axis=0)
    se = jnp.take(params["seg_tbl"], seg_ids, axis=0)
    pe = jnp.take(params["posi_tbl"], posi_ids, axis=0)
    cat = jnp.concatenate([we, ae, pe], axis=-1)
    h = jnp.tanh(cat @ params["W"].T + params["b"])
    h = h + se
    mean = jnp.mean(h, axis=-1, keepdims=True)
    var = jnp.mean((h - mean) ** 2, axis=-1, keepdims=True)
    normed = (h - mean) / jnp.sqrt(var + 1e-12)
    return normed * params["gamma"] + params["beta"]


if __name__ == "__main__":
    B, S, H = 2, 8, 128
    VOCAB, SEG_VOCAB, AGE_VOCAB, MAX_SEQ = 64, 2, 32, 16

    key = jax.random.PRNGKey(0)
    kp, kw, ka, ks = jax.random.split(key, 4)

    params = make_params(kp, VOCAB, SEG_VOCAB, AGE_VOCAB, MAX_SEQ, H)
    prepared = prepare_params(params)   # model-load-time: fold Linear + fuse + hi/lo split

    word_ids = jax.random.randint(kw, (B, S), 0, VOCAB, dtype=jnp.int32)
    age_ids = jax.random.randint(ka, (B, S), 0, AGE_VOCAB, dtype=jnp.int32)
    seg_ids = jax.random.randint(ks, (B, S), 0, SEG_VOCAB, dtype=jnp.int32)
    posi_ids = jnp.broadcast_to(jnp.arange(S, dtype=jnp.int32)[None, :], (B, S))

    # Default tile_n=512 is capped to 8 here by the >=2-grid-step logic (grid=(2,)),
    # exercising both the row grid and the TC-parallel axis.
    out = embedding_forward(word_ids, age_ids, seg_ids, posi_ids, prepared)
    out = jax.block_until_ready(out)

    ref = _reference(word_ids, age_ids, seg_ids, posi_ids, params)
    # atol relaxed slightly vs. 1e-5: the residual table is stored in bf16 (per perf
    # review), contributing ~1e-6-level absolute error after LayerNorm amplification.
    np.testing.assert_allclose(np.asarray(out), np.asarray(ref), atol=2e-5, rtol=1e-5)

    print("KERNEL_OK")
</pallas_src>

<mosaic_0001>
module attributes {stable_mosaic.version = 11 : i64} {
  func.func @_embedding_kernel(%arg0: i32, %arg1: memref<8x8xi32, #tpu.memory_space<vmem>>, %arg2: memref<112x128xbf16, #tpu.memory_space<vmem>>, %arg3: memref<112x128xbf16, #tpu.memory_space<vmem>>, %arg4: memref<2x128xf32, #tpu.memory_space<vmem>>, %arg5: memref<1x128xf32, #tpu.memory_space<vmem>>, %arg6: memref<1x128xf32, #tpu.memory_space<vmem>>, %arg7: memref<1x128xf32, #tpu.memory_space<vmem>>, %arg8: memref<8x128xf32, #tpu.memory_space<vmem>>) attributes {dimension_semantics = [#tpu.dimension_semantics<parallel>], iteration_bounds = array<i64: 2>, scalar_prefetch = 0 : i64, scratch_operands = 0 : i64, tpu.core_type = #tpu.core_type<tc>, window_params = [{transform_indices = @transform_0, window_bounds = array<i64: 8, 8>}, {pipeline_mode = #tpu.pipeline_mode<synchronous>, transform_indices = @transform_1, window_bounds = array<i64: 112, 128>}, {pipeline_mode = #tpu.pipeline_mode<synchronous>, transform_indices = @transform_2, window_bounds = array<i64: 112, 128>}, {pipeline_mode = #tpu.pipeline_mode<synchronous>, transform_indices = @transform_3, window_bounds = array<i64: 2, 128>}, {pipeline_mode = #tpu.pipeline_mode<synchronous>, transform_indices = @transform_4, window_bounds = array<i64: 1, 128>}, {pipeline_mode = #tpu.pipeline_mode<synchronous>, transform_indices = @transform_5, window_bounds = array<i64: 1, 128>}, {pipeline_mode = #tpu.pipeline_mode<synchronous>, transform_indices = @transform_6, window_bounds = array<i64: 1, 128>}, {transform_indices = @transform_7, window_bounds = array<i64: 8, 128>}]} {
    %c0 = arith.constant 0 : index
    %c0_0 = arith.constant 0 : index
    %0 = vector.load %arg1[%c0, %c0_0] : memref<8x8xi32, #tpu.memory_space<vmem>>, vector<8x8xi32>
    %1 = vector.extract_strided_slice %0 {offsets = [0, 0], sizes = [8, 1], strides = [1, 1]} : vector<8x8xi32> to vector<8x1xi32>
    %2 = vector.extract_strided_slice %0 {offsets = [0, 1], sizes = [8, 1], strides = [1, 1]} : vector<8x8xi32> to vector<8x1xi32>
    %3 = vector.extract_strided_slice %0 {offsets = [0, 2], sizes = [8, 1], strides = [1, 1]} : vector<8x8xi32> to vector<8x1xi32>
    %4 = vector.extract_strided_slice %0 {offsets = [0, 3], sizes = [8, 1], strides = [1, 1]} : vector<8x8xi32> to vector<8x1xi32>
    %5 = tpu.iota {dimensions = array<i32: 1>} : vector<8x112xi32>
    %6 = vector.broadcast %1 : vector<8x1xi32> to vector<8x112xi32>
    %7 = arith.cmpi eq, %5, %6 : vector<8x112xi32>
    %8 = vector.broadcast %2 : vector<8x1xi32> to vector<8x112xi32>
    %9 = arith.cmpi eq, %5, %8 : vector<8x112xi32>
    %10 = arith.ori %7, %9 : vector<8x112xi1>
    %11 = vector.broadcast %3 : vector<8x1xi32> to vector<8x112xi32>
    %12 = arith.cmpi eq, %5, %11 : vector<8x112xi32>
    %13 = arith.ori %10, %12 : vector<8x112xi1>
    %14 = arith.extui %13 : vector<8x112xi1> to vector<8x112xi32>
    %15 = arith.sitofp %14 : vector<8x112xi32> to vector<8x112xf32>
    %16 = arith.truncf %15 : vector<8x112xf32> to vector<8x112xbf16>
    %c0_1 = arith.constant 0 : index
    %c0_2 = arith.constant 0 : index
    %17 = vector.load %arg2[%c0_1, %c0_2] : memref<112x128xbf16, #tpu.memory_space<vmem>>, vector<112x128xbf16>
    %cst = arith.constant dense<0.000000e+00> : vector<8x128xf32>
    %18 = tpu.matmul %16, %17, %cst {dimension_numbers = #tpu.dot_dimension_numbers<[1], [0], [0], [1], [0, 0, 1, 1], [], []>} : vector<8x112xbf16>, vector<112x128xbf16>, vector<8x128xf32> -> vector<8x128xf32>
    %c0_3 = arith.constant 0 : index
    %c0_4 = arith.constant 0 : index
    %19 = vector.load %arg3[%c0_3, %c0_4] : memref<112x128xbf16, #tpu.memory_space<vmem>>, vector<112x128xbf16>
    %cst_5 = arith.constant dense<0.000000e+00> : vector<8x128xf32>
    %20 = tpu.matmul %16, %19, %cst_5 {dimension_numbers = #tpu.dot_dimension_numbers<[1], [0], [0], [1], [0, 0, 1, 1], [], []>} : vector<8x112xbf16>, vector<112x128xbf16>, vector<8x128xf32> -> vector<8x128xf32>
    %21 = arith.addf %18, %20 : vector<8x128xf32>
    %c0_6 = arith.constant 0 : index
    %c0_7 = arith.constant 0 : index
    %22 = vector.load %arg5[%c0_6, %c0_7] : memref<1x128xf32, #tpu.memory_space<vmem>>, vector<1x128xf32>
    %23 = vector.broadcast %22 : vector<1x128xf32> to vector<8x128xf32>
    %24 = arith.addf %21, %23 : vector<8x128xf32>
    %25 = math.tanh %24 : vector<8x128xf32>
    %c0_8 = arith.constant 0 : index
    %c0_9 = arith.constant 0 : index
    %26 = vector.load %arg4[%c0_8, %c0_9] : memref<2x128xf32, #tpu.memory_space<vmem>>, vector<2x128xf32>
    %27 = vector.extract_strided_slice %26 {offsets = [0, 0], sizes = [1, 128], strides = [1, 1]} : vector<2x128xf32> to vector<1x128xf32>
    %28 = vector.shape_cast %27 : vector<1x128xf32> to vector<1x128xf32>
    %29 = vector.broadcast %28 : vector<1x128xf32> to vector<8x128xf32>
    %c1_i32 = arith.constant 1 : i32
    %30 = vector.broadcast %c1_i32 : i32 to vector<8x1xi32>
    %31 = arith.cmpi eq, %4, %30 : vector<8x1xi32>
    %32 = vector.extract_strided_slice %26 {offsets = [1, 0], sizes = [1, 128], strides = [1, 1]} : vector<2x128xf32> to vector<1x128xf32>
    %33 = vector.shape_cast %31 : vector<8x1xi1> to vector<8x1xi1>
    %34 = vector.broadcast %33 : vector<8x1xi1> to vector<8x128xi1>
    %35 = vector.shape_cast %32 : vector<1x128xf32> to vector<1x128xf32>
    %36 = vector.broadcast %35 : vector<1x128xf32> to vector<8x128xf32>
    %37 = arith.select %34, %36, %29 : vector<8x128xi1>, vector<8x128xf32>
    %38 = arith.addf %25, %37 : vector<8x128xf32>
    %cst_10 = arith.constant dense<0.000000e+00> : vector<8xf32>
    %39 = vector.multi_reduction <add>, %38, %cst_10 [1] : vector<8x128xf32> to vector<8xf32>
    %40 = vector.shape_cast %39 : vector<8xf32> to vector<8x1xf32>
    %cst_11 = arith.constant 1.280000e+02 : f32
    %41 = vector.broadcast %cst_11 : f32 to vector<8x1xf32>
    %42 = arith.divf %40, %41 : vector<8x1xf32>
    %43 = vector.broadcast %42 : vector<8x1xf32> to vector<8x128xf32>
    %44 = arith.subf %38, %43 : vector<8x128xf32>
    %45 = arith.mulf %44, %44 : vector<8x128xf32>
    %cst_12 = arith.constant dense<0.000000e+00> : vector<8xf32>
    %46 = vector.multi_reduction <add>, %45, %cst_12 [1] : vector<8x128xf32> to vector<8xf32>
    %47 = vector.shape_cast %46 : vector<8xf32> to vector<8x1xf32>
    %cst_13 = arith.constant 1.280000e+02 : f32
    %48 = vector.broadcast %cst_13 : f32 to vector<8x1xf32>
    %49 = arith.divf %47, %48 : vector<8x1xf32>
    %50 = vector.broadcast %42 : vector<8x1xf32> to vector<8x128xf32>
    %51 = arith.subf %38, %50 : vector<8x128xf32>
    %cst_14 = arith.constant 9.99999996E-13 : f32
    %52 = vector.broadcast %cst_14 : f32 to vector<8x1xf32>
    %53 = arith.addf %49, %52 : vector<8x1xf32>
    %54 = math.rsqrt %53 : vector<8x1xf32>
    %55 = vector.broadcast %54 : vector<8x1xf32> to vector<8x128xf32>
    %56 = arith.mulf %51, %55 : vector<8x128xf32>
    %c0_15 = arith.constant 0 : index
    %c0_16 = arith.constant 0 : index
    %57 = vector.load %arg6[%c0_15, %c0_16] : memref<1x128xf32, #tpu.memory_space<vmem>>, vector<1x128xf32>
    %58 = vector.broadcast %57 : vector<1x128xf32> to vector<8x128xf32>
    %59 = arith.mulf %56, %58 : vector<8x128xf32>
    %c0_17 = arith.constant 0 : index
    %c0_18 = arith.constant 0 : index
    %60 = vector.load %arg7[%c0_17, %c0_18] : memref<1x128xf32, #tpu.memory_space<vmem>>, vector<1x128xf32>
    %61 = vector.broadcast %60 : vector<1x128xf32> to vector<8x128xf32>
    %62 = arith.addf %59, %61 : vector<8x128xf32>
    %c0_19 = arith.constant 0 : index
    %c0_20 = arith.constant 0 : index
    %63 = vector.load %arg8[%c0_19, %c0_20] : memref<8x128xf32, #tpu.memory_space<vmem>>, vector<8x128xf32>
    tpu.vector_store %arg8[%c0_19, %c0_20], %62 {strides = array<i32>} : memref<8x128xf32, #tpu.memory_space<vmem>>, vector<8x128xf32>,
    return
  }
  func.func @transform_0(%arg0: i32) -> (i32, i32) {
    %c0_i32 = arith.constant 0 : i32
    %c0_i32_0 = arith.constant 0 : i32
    return %arg0, %c0_i32 : i32, i32
  }
  func.func @transform_1(%arg0: i32) -> (i32, i32) {
    %c0_i32 = arith.constant 0 : i32
    %c0_i32_0 = arith.constant 0 : i32
    %c0_i32_1 = arith.constant 0 : i32
    return %c0_i32, %c0_i32_0 : i32, i32
  }
  func.func @transform_2(%arg0: i32) -> (i32, i32) {
    %c0_i32 = arith.constant 0 : i32
    %c0_i32_0 = arith.constant 0 : i32
    %c0_i32_1 = arith.constant 0 : i32
    return %c0_i32, %c0_i32_0 : i32, i32
  }
  func.func @transform_3(%arg0: i32) -> (i32, i32) {
    %c0_i32 = arith.constant 0 : i32
    %c0_i32_0 = arith.constant 0 : i32
    %c0_i32_1 = arith.constant 0 : i32
    return %c0_i32, %c0_i32_0 : i32, i32
  }
  func.func @transform_4(%arg0: i32) -> (i32, i32) {
    %c0_i32 = arith.constant 0 : i32
    %c0_i32_0 = arith.constant 0 : i32
    %c0_i32_1 = arith.constant 0 : i32
    return %c0_i32, %c0_i32_0 : i32, i32
  }
  func.func @transform_5(%arg0: i32) -> (i32, i32) {
    %c0_i32 = arith.constant 0 : i32
    %c0_i32_0 = arith.constant 0 : i32
    %c0_i32_1 = arith.constant 0 : i32
    return %c0_i32, %c0_i32_0 : i32, i32
  }
  func.func @transform_6(%arg0: i32) -> (i32, i32) {
    %c0_i32 = arith.constant 0 : i32
    %c0_i32_0 = arith.constant 0 : i32
    %c0_i32_1 = arith.constant 0 : i32
    return %c0_i32, %c0_i32_0 : i32, i32
  }
  func.func @transform_7(%arg0: i32) -> (i32, i32) {
    %c0_i32 = arith.constant 0 : i32
    %c0_i32_0 = arith.constant 0 : i32
    return %arg0, %c0_i32 : i32, i32
  }
}

</mosaic_0001>

<llo_original>
// kernel: tpu_custom_call.1
$region0: #{tpu_custom_call.1}
  #allocation0 [shape = 'u32[]', space=smem, size = 0x4, offset = 0x4, fixed_abs, tag = 'smem constant byte address 0x4 - core index']
  #allocation1 [shape = 'u32[144,128]{1,0:T(1,128)}', space=vmem, size = 0x12000, scoped, tag = 'internal scratch']
  %s0 = inlined_call_operand.vmem [shape: s32[16,8], index: 0, kind: input, shape index: {}]
  %s1 = inlined_call_operand.hbm [shape: bf16[112,128], index: 1, kind: input, shape index: {}]
  %s2 = inlined_call_operand.hbm [shape: bf16[112,128], index: 2, kind: input, shape index: {}]
  %s3 = inlined_call_operand.vmem [shape: f32[2,128], index: 3, kind: input, shape index: {}]
  %s4 = inlined_call_operand.vmem [shape: f32[1,128], index: 4, kind: input, shape index: {}]
  %s5 = inlined_call_operand.vmem [shape: f32[1,128], index: 5, kind: input, shape index: {}]
  %s6 = inlined_call_operand.vmem [shape: f32[1,128], index: 6, kind: input, shape index: {}]
  %s7 = inlined_call_operand.hbm [shape: f32[16,128], index: 7, kind: output, shape index: {}]
  %s8 = sld [smem:[#allocation0]]
  $region69: #{tpu_custom_call.1} parent=0
    _
  %s10 = ssub.s32 1, %s8
  %s11 = scalar_select 0, %s10, %s8
  $region1: #{tpu_custom_call.1} parent=0
    #allocation2 [shape = 'u8[28672]{0}', space=vmem, size = 0x7000, scoped, tag = 'input window, operand 1, single buffered']
    #allocation3 [shape = 's32[2]{0}', space=sflag, size = 0x8, scoped, tag = 'scoped memory for tpu_custom_call.1']
    #allocation4 [shape = 's32[2]{0}', space=sflag, size = 0x8, scoped, tag = 'scoped memory for tpu_custom_call.1']
    #allocation5 [shape = 'u8[28672]{0}', space=vmem, size = 0x7000, scoped, tag = 'input window, operand 2, single buffered']
    #allocation6 [shape = 's32[1]{0}', space=sflag, size = 0x4, scoped, tag = 'scoped memory for tpu_custom_call.1']
    #allocation7 [shape = 'u8[8192]{0}', space=vmem, size = 0x2000, scoped, tag = 'output window, operand 0']
    %12 = vsyncpa [#allocation3], 0
    %13 = vsyncpa [#allocation6], 0
    %14 = vsyncpa [#allocation4], 0
    %s15 = scalar_lea.sflag [#allocation4], 1
    %16 = vsyncpa %s15, 0
    loop: start=0, step=1, limit=4
    $region2: #{tpu_custom_call.1} parent=1 // loop_pre_header
      _
    $region3: #{tpu_custom_call.1} parent=1 // loop_header
      %s18 = sphi 0, %s22
      %p19 = scmp.ge.s32.totalorder %s18, 4
      %s28 = sphi 0, %s30
      %s31 = sphi 0, %s28
      %s32 = sphi 0, %s31
      %s48 = sphi 0, %s32
      %s52 = sphi 0, %s52
      %s54 = sphi 0, %s52
      %s55 = sphi 0, %s54
      %s69 = sphi 0, %s55
      %s73 = sphi 0, %s73
      %s75 = sphi 0, %s73
      %s76 = sphi 0, %s75
      %s90 = sphi 0, %s76
      %s94 = sphi 0, %s94
      %s96 = sphi 0, %s94
      %s97 = sphi 0, %s96
      %s111 = sphi 0, %s97
      %s115 = sphi 0, %s115
      %s117 = sphi 0, %s115
      %s118 = sphi 0, %s117
      %s132 = sphi 0, %s118
      %s136 = sphi 0, %s136
      %s138 = sphi 0, %s136
      %s139 = sphi 0, %s138
      %s153 = sphi 0, %s139
      %s157 = sphi 0, %s157
      %s159 = sphi 0, %s157
      %s160 = sphi 0, %s159
      %s174 = sphi 0, %s160
      %s180 = sphi 0, %s182
      %s183 = sphi 0, %s180
      %s184 = sphi 0, %s183
      %s200 = sphi 0, %s184
    $region4: #{tpu_custom_call.1} parent=1 // loop_header_branch
      %21 = sbr.rel (%p19) target = $region8
    $region5: #{tpu_custom_call.1} parent=1 // loop_body
      %s23 = ssub.s32 %s18, 1
      %s24 = ssub.s32 %s18, 2
      %s25 = sadd.s32 %s18, 1
      %s26 = ssub.s32 %s18, %s25
      %p27 = scmp.eq.s32.totalorder %s26, 0
      %s29 = sadd.s32 %s28, 1
      %s30 = scalar_select %p27, %s28, %s29
      %p33 = pneg %p27
      %p34 = scmp.eq.s32.totalorder %s18, 1
      %p35 = por %p33, %p34
      %p36 = scmp.ne.s32.totalorder %s28, %s31
      %p37 = scmp.eq.s32.totalorder %s18, 0
      %p38 = por %p36, %p37
      %p39 = scmp.ne.s32.totalorder %s28, %s31
      %p40 = scmp.eq.s32.totalorder %s23, 1
      %p41 = por %p39, %p40
      %p42 = scmp.ne.s32.totalorder %s31, %s32
      %p43 = scmp.eq.s32.totalorder %s23, 0
      %p44 = por %p42, %p43
      %p45 = scmp.ne.s32.totalorder %s31, %s32
      %p46 = scmp.eq.s32.totalorder %s24, 1
      %p47 = por %p45, %p46
      %p49 = scmp.ne.s32.totalorder %s32, %s48
      %p50 = scmp.eq.s32.totalorder %s24, 0
      %p51 = por %p49, %p50
      %s53 = sadd.s32 %s52, 1
      %p56 = scmp.eq.s32.totalorder %s18, 1
      %p57 = scmp.ne.s32.totalorder %s52, %s54
      %p58 = scmp.eq.s32.totalorder %s18, 0
      %p59 = por %p57, %p58
      %p60 = scmp.ne.s32.totalorder %s52, %s54
      %p61 = scmp.eq.s32.totalorder %s23, 1
      %p62 = por %p60, %p61
      %p63 = scmp.ne.s32.totalorder %s54, %s55
      %p64 = scmp.eq.s32.totalorder %s23, 0
      %p65 = por %p63, %p64
      %p66 = scmp.ne.s32.totalorder %s54, %s55
      %p67 = scmp.eq.s32.totalorder %s24, 1
      %p68 = por %p66, %p67
      %p70 = scmp.ne.s32.totalorder %s55, %s69
      %p71 = scmp.eq.s32.totalorder %s24, 0
      %p72 = por %p70, %p71
      %s74 = sadd.s32 %s73, 1
      %p77 = scmp.eq.s32.totalorder %s18, 1
      %p78 = scmp.ne.s32.totalorder %s73, %s75
      %p79 = scmp.eq.s32.totalorder %s18, 0
      %p80 = por %p78, %p79
      %p81 = scmp.ne.s32.totalorder %s73, %s75
      %p82 = scmp.eq.s32.totalorder %s23, 1
      %p83 = por %p81, %p82
      %p84 = scmp.ne.s32.totalorder %s75, %s76
      %p85 = scmp.eq.s32.totalorder %s23, 0
      %p86 = por %p84, %p85
      %p87 = scmp.ne.s32.totalorder %s75, %s76
      %p88 = scmp.eq.s32.totalorder %s24, 1
      %p89 = por %p87, %p88
      %p91 = scmp.ne.s32.totalorder %s76, %s90
      %p92 = scmp.eq.s32.totalorder %s24, 0
      %p93 = por %p91, %p92
      %s95 = sadd.s32 %s94, 1
      %p98 = scmp.eq.s32.totalorder %s18, 1
      %p99 = scmp.ne.s32.totalorder %s94, %s96
      %p100 = scmp.eq.s32.totalorder %s18, 0
      %p101 = por %p99, %p100
      %p102 = scmp.ne.s32.totalorder %s94, %s96
      %p103 = scmp.eq.s32.totalorder %s23, 1
      %p104 = por %p102, %p103
      %p105 = scmp.ne.s32.totalorder %s96, %s97
      %p106 = scmp.eq.s32.totalorder %s23, 0
      %p107 = por %p105, %p106
      %p108 = scmp.ne.s32.totalorder %s96, %s97
      %p109 = scmp.eq.s32.totalorder %s24, 1
      %p110 = por %p108, %p109
      %p112 = scmp.ne.s32.totalorder %s97, %s111
      %p113 = scmp.eq.s32.totalorder %s24, 0
      %p114 = por %p112, %p113
      %s116 = sadd.s32 %s115, 1
      %p119 = scmp.eq.s32.totalorder %s18, 1
      %p120 = scmp.ne.s32.totalorder %s115, %s117
      %p121 = scmp.eq.s32.totalorder %s18, 0
      %p122 = por %p120, %p121
      %p123 = scmp.ne.s32.totalorder %s115, %s117
      %p124 = scmp.eq.s32.totalorder %s23, 1
      %p125 = por %p123, %p124
      %p126 = scmp.ne.s32.totalorder %s117, %s118
      %p127 = scmp.eq.s32.totalorder %s23, 0
      %p128 = por %p126, %p127
      %p129 = scmp.ne.s32.totalorder %s117, %s118
      %p130 = scmp.eq.s32.totalorder %s24, 1
      %p131 = por %p129, %p130
      %p133 = scmp.ne.s32.totalorder %s118, %s132
      %p134 = scmp.eq.s32.totalorder %s24, 0
      %p135 = por %p133, %p134
      %s137 = sadd.s32 %s136, 1
      %p140 = scmp.eq.s32.totalorder %s18, 1
      %p141 = scmp.ne.s32.totalorder %s136, %s138
      %p142 = scmp.eq.s32.totalorder %s18, 0
      %p143 = por %p141, %p142
      %p144 = scmp.ne.s32.totalorder %s136, %s138
      %p145 = scmp.eq.s32.totalorder %s23, 1
      %p146 = por %p144, %p145
      %p147 = scmp.ne.s32.totalorder %s138, %s139
      %p148 = scmp.eq.s32.totalorder %s23, 0
      %p149 = por %p147, %p148
      %p150 = scmp.ne.s32.totalorder %s138, %s139
      %p151 = scmp.eq.s32.totalorder %s24, 1
      %p152 = por %p150, %p151
      %p154 = scmp.ne.s32.totalorder %s139, %s153
      %p155 = scmp.eq.s32.totalorder %s24, 0
      %p156 = por %p154, %p155
      %s158 = sadd.s32 %s157, 1
      %p161 = scmp.eq.s32.totalorder %s18, 1
      %p162 = scmp.ne.s32.totalorder %s157, %s159
      %p163 = scmp.eq.s32.totalorder %s18, 0
      %p164 = por %p162, %p163
      %p165 = scmp.ne.s32.totalorder %s157, %s159
      %p166 = scmp.eq.s32.totalorder %s23, 1
      %p167 = por %p165, %p166
      %p168 = scmp.ne.s32.totalorder %s159, %s160
      %p169 = scmp.eq.s32.totalorder %s23, 0
      %p170 = por %p168, %p169
      %p171 = scmp.ne.s32.totalorder %s159, %s160
      %p172 = scmp.eq.s32.totalorder %s24, 1
      %p173 = por %p171, %p172
      %p175 = scmp.ne.s32.totalorder %s160, %s174
      %p176 = scmp.eq.s32.totalorder %s24, 0
      %p177 = por %p175, %p176
      %s178 = ssub.s32 %s18, %s25
      %p179 = scmp.eq.s32.totalorder %s178, 0
      %s181 = sadd.s32 %s180, 1
      %s182 = scalar_select %p179, %s180, %s181
      %p185 = pneg %p179
      %p186 = scmp.eq.s32.totalorder %s18, 1
      %p187 = por %p185, %p186
      %p188 = scmp.ne.s32.totalorder %s180, %s183
      %p189 = scmp.eq.s32.totalorder %s18, 0
      %p190 = por %p188, %p189
      %p191 = scmp.ne.s32.totalorder %s180, %s183
      %p192 = scmp.eq.s32.totalorder %s23, 1
      %p193 = por %p191, %p192
      %p194 = scmp.ne.s32.totalorder %s183, %s184
      %p195 = scmp.eq.s32.totalorder %s23, 0
      %p196 = por %p194, %p195
      %p197 = scmp.ne.s32.totalorder %s183, %s184
      %p198 = scmp.eq.s32.totalorder %s24, 1
      %p199 = por %p197, %p198
      %p201 = scmp.ne.s32.totalorder %s184, %s200
      %p202 = scmp.eq.s32.totalorder %s24, 0
      %p203 = por %p201, %p202
      %p204 = scmp.le.s32.totalorder 1, %s18
      %p205 = scmp.lt.s32.totalorder %s18, 3
      %p206 = pnand %p204, %p205
      %p207 = pneg %p206
      // Predicated region
      $region9: #{tpu_custom_call.1} parent=5 // pred_check
        _
      $region10: #{tpu_custom_call.1} parent=5 // pred_check_branch
        %209 = sbr.rel (%p206) target = $region12
      $region11: #{tpu_custom_call.1} parent=5 // pred_region
        %s210 = ssub.s32 %s18, 1
        // Predicated region
        $region13: #{tpu_custom_call.1} parent=11 // pred_check
          %p211 = pneg %p65
        $region14: #{tpu_custom_call.1} parent=11 // pred_check_branch
          %213 = sbr.rel (%p211) target = $region16
        $region15: #{tpu_custom_call.1} parent=11 // pred_region
          %s215 = ssub.s32 896, 896
          %216 = vsyncadd [#allocation3], %s215
          %s217 = sshll.u32 [#allocation2], 4
          %s218 = int_to_ptr.vmem [resolvable:$true] %s217
          %223 = dma.hbm_to_vmem [thread:$0]  %s1, 896, %s218, [#allocation3], 64, 64, 4
        $region16: #{tpu_custom_call.1} parent=11 // pred_fallthru
          _
        // Predicated region
        $region17: #{tpu_custom_call.1} parent=11 // pred_check
          %p224 = pneg %p86
        $region18: #{tpu_custom_call.1} parent=11 // pred_check_branch
          %226 = sbr.rel (%p224) target = $region20
        $region19: #{tpu_custom_call.1} parent=11 // pred_region
          %s228 = ssub.s32 896, 896
          %229 = vsyncadd [#allocation6], %s228
          %s230 = sshll.u32 [#allocation5], 4
          %s231 = int_to_ptr.vmem [resolvable:$true] %s230
          %236 = dma.hbm_to_vmem [thread:$0]  %s2, 896, %s231, [#allocation6], 64, 64, 4
        $region20: #{tpu_custom_call.1} parent=11 // pred_fallthru
          _
        // Predicated region
        $region21: #{tpu_custom_call.1} parent=11 // pred_check
          %p237 = pneg %p107
        $region22: #{tpu_custom_call.1} parent=11 // pred_check_branch
          %239 = sbr.rel (%p237) target = $region24
        $region23: #{tpu_custom_call.1} parent=11 // pred_region
          _
        $region24: #{tpu_custom_call.1} parent=11 // pred_fallthru
          _
        // Predicated region
        $region25: #{tpu_custom_call.1} parent=11 // pred_check
          %p240 = pneg %p128
        $region26: #{tpu_custom_call.1} parent=11 // pred_check_branch
          %242 = sbr.rel (%p240) target = $region28
        $region27: #{tpu_custom_call.1} parent=11 // pred_region
          _
        $region28: #{tpu_custom_call.1} parent=11 // pred_fallthru
          _
        // Predicated region
        $region29: #{tpu_custom_call.1} parent=11 // pred_check
          %p243 = pneg %p149
        $region30: #{tpu_custom_call.1} parent=11 // pred_check_branch
          %245 = sbr.rel (%p243) target = $region32
        $region31: #{tpu_custom_call.1} parent=11 // pred_region
          _
        $region32: #{tpu_custom_call.1} parent=11 // pred_fallthru
          _
        // Predicated region
        $region33: #{tpu_custom_call.1} parent=11 // pred_check
          %p246 = pneg %p170
        $region34: #{tpu_custom_call.1} parent=11 // pred_check_branch
          %248 = sbr.rel (%p246) target = $region36
        $region35: #{tpu_custom_call.1} parent=11 // pred_region
          _
        $region36: #{tpu_custom_call.1} parent=11 // pred_fallthru
          _
      $region12: #{tpu_custom_call.1} parent=5 // pred_fallthru
        _
      %p249 = scmp.lt.s32.totalorder %s18, 2
      // Predicated region
      $region37: #{tpu_custom_call.1} parent=5 // pred_check
        %p250 = pneg %p249
      $region38: #{tpu_custom_call.1} parent=5 // pred_check_branch
        %252 = sbr.rel (%p250) target = $region40
      $region39: #{tpu_custom_call.1} parent=5 // pred_region
        // Predicated region
        $region41: #{tpu_custom_call.1} parent=39 // pred_check
          %p253 = pneg %p38
        $region42: #{tpu_custom_call.1} parent=39 // pred_check_branch
          %255 = sbr.rel (%p253) target = $region44
        $region43: #{tpu_custom_call.1} parent=39 // pred_region
          %p256 = scmp.lt.s32.totalorder %s18, 1
          %s257 = scalar_select %p256, %s18, 1
          %s258 = smul.addr %s257, 8
          %s259 = scalar_lea.vmem %s0, %s258
        $region44: #{tpu_custom_call.1} parent=39 // pred_fallthru
          _
      $region40: #{tpu_custom_call.1} parent=5 // pred_fallthru
        _
      %p260 = scmp.le.s32.totalorder 1, %s18
      %p261 = scmp.lt.s32.totalorder %s18, 3
      %p262 = pnand %p260, %p261
      %p263 = pneg %p262
      // Predicated region
      $region45: #{tpu_custom_call.1} parent=5 // pred_check
        _
      $region46: #{tpu_custom_call.1} parent=5 // pred_check_branch
        %265 = sbr.rel (%p262) target = $region48
      $region47: #{tpu_custom_call.1} parent=5 // pred_region
        %s266 = ssub.s32 %s18, 1
        // Predicated region
        $region49: #{tpu_custom_call.1} parent=47 // pred_check
          %p267 = pneg %p65
        $region50: #{tpu_custom_call.1} parent=47 // pred_check_branch
          %269 = sbr.rel (%p267) target = $region52
        $region51: #{tpu_custom_call.1} parent=47 // pred_region
          %270 = dma.done [#allocation3], 896
        $region52: #{tpu_custom_call.1} parent=47 // pred_fallthru
          _
        // Predicated region
        $region53: #{tpu_custom_call.1} parent=47 // pred_check
          %p271 = pneg %p86
        $region54: #{tpu_custom_call.1} parent=47 // pred_check_branch
          %273 = sbr.rel (%p271) target = $region56
        $region55: #{tpu_custom_call.1} parent=47 // pred_region
          %274 = dma.done [#allocation6], 896
        $region56: #{tpu_custom_call.1} parent=47 // pred_fallthru
          _
        %p275 = scmp.lt.s32.totalorder %s23, 1
        %s276 = scalar_select %p275, %s23, 1
        %s277 = smul.addr %s276, 8
        %s278 = scalar_lea.vmem %s0, %s277
        %p279 = pneg %p44
        %p280 = pneg %p41
        %p281 = pneg %p65
        %p282 = pneg %p62
        %p283 = pneg %p86
        %p284 = pneg %p83
        %p285 = pneg %p107
        %p286 = pneg %p104
        %p287 = pneg %p128
        %p288 = pneg %p125
        %p289 = pneg %p149
        %p290 = pneg %p146
        %p291 = pneg %p170
        %p292 = pneg %p167
        %p293 = pneg %p196
        %p294 = pneg %p193
        %s295 = sand.u32 %s183, 1
        %s296 = scalar_lea.sflag [#allocation4], %s295
        %s297 = sand.u32 %s183, 1
        %s298 = smul.addr %s297, 8
        %s299 = scalar_lea.vmem [#allocation7], %s298
        %p300 = scmp.lt.s32.totalorder %s23, 1
        %s301 = scalar_select %p300, %s23, 1
        %s302 = smul.addr %s301, 8
        %s303 = scalar_lea.vmem %s0, %s302
        %v305 = vld [vmem:[%s303] sm:$0xff]
        %v306 = vlaneseq
        %v307 = vand.u32 %v306, 127
        %308 = vset.pattern.permute.xlu0 0
        %309 = vperm.xlu0 %308, %v305
        %v310 = vpop.permute.xlu0 %309
        %vm311 = vcmp.eq.s32.totalorder %v307, %v310
        %312 = vset.pattern.permute.xlu0 1
        %313 = vperm.xlu0 %312, %v305
        %v314 = vpop.permute.xlu0 %313
        %vm315 = vcmp.eq.s32.totalorder %v307, %v314
        %vm316 = vmor %vm311, %vm315
        %317 = vset.pattern.permute.xlu0 2
        %318 = vperm.xlu0 %317, %v305
        %v319 = vpop.permute.xlu0 %318
        %vm320 = vcmp.eq.s32.totalorder %v307, %v319
        %vm321 = vmor %vm316, %vm320
        %v322 = vsel %vm321, 1, 0
        %v323 = vcvt.s32.f32 %v322
        %v324 = vpack.c.bf16 %v323, %v323
        %v325 = vld [vmem:[#allocation2] sm:$0xf]
        %v326 = vld [vmem:[#allocation2 + $0x4] sm:$0xf]
        %v327 = vld [vmem:[#allocation2 + $0x8] sm:$0xf]
        %v328 = vld [vmem:[#allocation2 + $0xc] sm:$0xf]
        %v329 = vld [vmem:[#allocation2 + $0x10] sm:$0xf]
        %v330 = vld [vmem:[#allocation2 + $0x14] sm:$0xf]
        %v331 = vld [vmem:[#allocation2 + $0x18] sm:$0xf]
        %v332 = vld [vmem:[#allocation2 + $0x1c] sm:$0xf]
        %v333 = vld [vmem:[#allocation2 + $0x20] sm:$0xf]
        %v334 = vld [vmem:[#allocation2 + $0x24] sm:$0xf]
        %v335 = vld [vmem:[#allocation2 + $0x28] sm:$0xf]
        %v336 = vld [vmem:[#allocation2 + $0x2c] sm:$0xf]
        %v337 = vld [vmem:[#allocation2 + $0x30] sm:$0xf]
        %v338 = vld [vmem:[#allocation2 + $0x34] sm:$0xf]
        %v339 = vld [vmem:[#allocation5] sm:$0xf]
        %v340 = vld [vmem:[#allocation5 + $0x4] sm:$0xf]
        %v341 = vld [vmem:[#allocation5 + $0x8] sm:$0xf]
        %v342 = vld [vmem:[#allocation5 + $0xc] sm:$0xf]
        %v343 = vld [vmem:[#allocation5 + $0x10] sm:$0xf]
        %v344 = vld [vmem:[#allocation5 + $0x14] sm:$0xf]
        %v345 = vld [vmem:[#allocation5 + $0x18] sm:$0xf]
        %v346 = vld [vmem:[#allocation5 + $0x1c] sm:$0xf]
        %v347 = vld [vmem:[#allocation5 + $0x20] sm:$0xf]
        %v348 = vld [vmem:[#allocation5 + $0x24] sm:$0xf]
        %v349 = vld [vmem:[#allocation5 + $0x28] sm:$0xf]
        %v350 = vld [vmem:[#allocation5 + $0x2c] sm:$0xf]
        %v351 = vld [vmem:[#allocation5 + $0x30] sm:$0xf]
        %v352 = vld [vmem:[#allocation5 + $0x34] sm:$0xf]
        %v367 = vunpack.c.l.b16 %v339
        %v368 = vunpack.c.l.b16 %v340
        %v369 = vunpack.c.l.b16 %v341
        %v370 = vunpack.c.l.b16 %v342
        %v371 = vunpack.c.l.b16 %v343
        %v372 = vunpack.c.l.b16 %v344
        %v373 = vunpack.c.l.b16 %v345
        %v374 = vunpack.c.l.b16 %v346
        %v375 = vunpack.c.l.b16 %v347
        %v376 = vunpack.c.l.b16 %v348
        %v377 = vunpack.c.l.b16 %v349
        %v378 = vunpack.c.l.b16 %v350
        %v379 = vunpack.c.l.b16 %v351
        %v380 = vunpack.c.l.b16 %v352
        %v381 = vpack.c.b16 %v368, %v367
        %v382 = vpack.c.b16 %v370, %v369
        %v383 = vpack.c.b16 %v372, %v371
        %v384 = vpack.c.b16 %v374, %v373
        %v385 = vpack.c.b16 %v376, %v375
        %v386 = vpack.c.b16 %v378, %v377
        %v387 = vpack.c.b16 %v380, %v379
        %vm395 = vcmask 916480
        %v397 = vsel %vm395, %v324, 0
        %399 = vmatprep.subr.bf16.mxu0 0
        %400 = vmatpush1.bf16.msra.mxu0 %v381
        %401 = vmatprep.subr.bf16.mxu0 0
        %402 = vmatpush1.bf16.msra.mxu0 %v382
        %403 = vmatprep.subr.bf16.mxu0 0
        %404 = vmatpush1.bf16.msra.mxu0 %v383
        %405 = vmatprep.subr.bf16.mxu0 0
        %406 = vmatpush1.bf16.msra.mxu0 %v384
        %407 = vmatprep.subr.bf16.mxu0 0
        %408 = vmatpush1.bf16.msra.mxu0 %v385
        %409 = vmatprep.subr.bf16.mxu0 0
        %410 = vmatpush1.bf16.msra.mxu0 %v386
        %411 = vmatprep.subr.bf16.mxu0 0
        %412 = vmatpush1.bf16.msra.mxu0 %v387
        %413 = vmatprep.subr.bf16.mxu0 0
        %414 = vmatpush1.bf16.msra.mxu0 0
        %415 = vmatprep.subr.bf16.mxu0 0
        %416 = vmatpush1.bf16.msra.mxu0 0
        %417 = vmatprep.subr.bf16.mxu0 0
        %418 = vmatpush1.bf16.msra.mxu0 0
        %419 = vmatprep.subr.bf16.mxu0 0
        %420 = vmatpush1.bf16.msra.mxu0 0
        %421 = vmatprep.subr.bf16.mxu0 0
        %422 = vmatpush1.bf16.msra.mxu0 0
        %423 = vmatprep.subr.bf16.mxu0 0
        %424 = vmatpush1.bf16.msra.mxu0 0
        %425 = vmatprep.subr.bf16.mxu0 0
        %426 = vmatpush1.bf16.msra.mxu0 0
        %427 = vmatprep.subr.bf16.mxu0 0
        %428 = vmatpush1.bf16.msra.mxu0 0
        %429 = vmatprep.subr.bf16.mxu0 0
        %430 = vmatpush1.bf16.msra.mxu0 0
        %431 = vmatprep.mubr.bf16.mxu0 0
        %432 = vmatmul.mubr.bf16.gmra.mrb[0].mxu0 %v397
        %v433 = vpop.f32.mrb[0].mxu0
        %v434 = vadd.f32 0.0, %v433
        %v435 = vpop.f32.mrb[0].mxu0
        %v436 = vpop.f32.mrb[0].mxu0
        %v437 = vpop.f32.mrb[0].mxu0
        %438 = vdwg.mxu0
        %v453 = vunpack.c.l.b16 %v325
        %v454 = vunpack.c.l.b16 %v326
        %v455 = vunpack.c.l.b16 %v327
        %v456 = vunpack.c.l.b16 %v328
        %v457 = vunpack.c.l.b16 %v329
        %v458 = vunpack.c.l.b16 %v330
        %v459 = vunpack.c.l.b16 %v331
        %v460 = vunpack.c.l.b16 %v332
        %v461 = vunpack.c.l.b16 %v333
        %v462 = vunpack.c.l.b16 %v334
        %v463 = vunpack.c.l.b16 %v335
        %v464 = vunpack.c.l.b16 %v336
        %v465 = vunpack.c.l.b16 %v337
        %v466 = vunpack.c.l.b16 %v338
        %v467 = vpack.c.b16 %v454, %v453
        %v468 = vpack.c.b16 %v456, %v455
        %v469 = vpack.c.b16 %v458, %v457
        %v470 = vpack.c.b16 %v460, %v459
        %v471 = vpack.c.b16 %v462, %v461
        %v472 = vpack.c.b16 %v464, %v463
        %v473 = vpack.c.b16 %v466, %v465
        %481 = vmatprep.subr.bf16.mxu0 0
        %482 = vmatpush1.bf16.msra.mxu0 %v467
        %483 = vmatprep.subr.bf16.mxu0 0
        %484 = vmatpush1.bf16.msra.mxu0 %v468
        %485 = vmatprep.subr.bf16.mxu0 0
        %486 = vmatpush1.bf16.msra.mxu0 %v469
        %487 = vmatprep.subr.bf16.mxu0 0
        %488 = vmatpush1.bf16.msra.mxu0 %v470
        %489 = vmatprep.subr.bf16.mxu0 0
        %490 = vmatpush1.bf16.msra.mxu0 %v471
        %491 = vmatprep.subr.bf16.mxu0 0
        %492 = vmatpush1.bf16.msra.mxu0 %v472
        %493 = vmatprep.subr.bf16.mxu0 0
        %494 = vmatpush1.bf16.msra.mxu0 %v473
        %495 = vmatprep.subr.bf16.mxu0 0
        %496 = vmatpush1.bf16.msra.mxu0 0
        %497 = vmatprep.subr.bf16.mxu0 0
        %498 = vmatpush1.bf16.msra.mxu0 0
        %499 = vmatprep.subr.bf16.mxu0 0
        %500 = vmatpush1.bf16.msra.mxu0 0
        %501 = vmatprep.subr.bf16.mxu0 0
        %502 = vmatpush1.bf16.msra.mxu0 0
        %503 = vmatprep.subr.bf16.mxu0 0
        %504 = vmatpush1.bf16.msra.mxu0 0
        %505 = vmatprep.subr.bf16.mxu0 0
        %506 = vmatpush1.bf16.msra.mxu0 0
        %507 = vmatprep.subr.bf16.mxu0 0
        %508 = vmatpush1.bf16.msra.mxu0 0
        %509 = vmatprep.subr.bf16.mxu0 0
        %510 = vmatpush1.bf16.msra.mxu0 0
        %511 = vmatprep.subr.bf16.mxu0 0
        %512 = vmatpush1.bf16.msra.mxu0 0
        %513 = vmatprep.mubr.bf16.mxu0 0
        %514 = vmatmul.mubr.bf16.gmra.mrb[0].mxu0 %v397
        %v515 = vpop.f32.mrb[0].mxu0
        %v516 = vadd.f32 %v434, %v515
        %v517 = vpop.f32.mrb[0].mxu0
        %v518 = vpop.f32.mrb[0].mxu0
        %v519 = vpop.f32.mrb[0].mxu0
        %520 = vdwg.mxu0
        %v521 = vld [vmem:[%s4] sm:$0x1]
        %v523 = vlaneseq
        %v524 = vshrl.u32 %v523, 7
        %v525 = vsub.s32 0, %v524
        %v526 = vrot.slane %v521, %v525
        %v528 = vadd.f32 %v516, %v526
        %v529 = vtanh.pop %v528
        %v530 = vld [vmem:[%s3] sm:$0x3]
        %v531 = vlaneseq
        %v532 = vshrl.u32 %v531, 7
        %v533 = vsub.s32 0, %v532
        %v534 = vrot.slane %v530, %v533
        %vm535 = vcmp.eq.s32.totalorder %v305, 1
        %v536 = vsel %vm535, 1, 0
        %537 = vset.pattern.permute.xlu0 3
        %538 = vperm.xlu0 %537, %v536
        %v539 = vpop.permute.xlu0 %538
        %vm540 = vcmp.eq.s32.totalorder %v539, 1
        %v541 = vlaneseq
        %v542 = vshrl.u32 %v541, 7
        %v543 = vsub.s32 1, %v542
        %v544 = vrot.slane %v530, %v543
        %v545 = vsel %vm540, %v544, %v534
        %v546 = vadd.f32 %v529, %v545
        %547 = vadd.xlane.f32.xlu0 %v546
        %v548 = vpop.xlane.xlu0 %547
        %v549 = vrcp.pop 128.0
        %v550 = vmul.f32 %v548, %v549
        %v551 = vsub.f32 %v546, %v550
        %v552 = vmul.f32 %v551, %v551
        %553 = vadd.xlane.f32.xlu0 %v552
        %v554 = vpop.xlane.xlu0 %553
        %v555 = vmul.f32 %v554, %v549
        %v556 = vadd.f32 %v555, 1e-12
        %v557 = vrsqrt.pop %v556
        %v558 = vmul.f32 %v551, %v557
        %v559 = vld [vmem:[%s5] sm:$0x1]
        %v561 = vlaneseq
        %v562 = vshrl.u32 %v561, 7
        %v563 = vsub.s32 0, %v562
        %v564 = vrot.slane %v559, %v563
        %v566 = vmul.f32 %v558, %v564
        %v567 = vld [vmem:[%s6] sm:$0x1]
        %v569 = vlaneseq
        %v570 = vshrl.u32 %v569, 7
        %v571 = vsub.s32 0, %v570
        %v572 = vrot.slane %v567, %v571
        %v574 = vadd.f32 %v566, %v572
        %575 = vst [vmem:[%s299] sm:$0xff] %v574
        %s576 = sand.u32 %s183, 1
        %s577 = scalar_lea.sflag [#allocation4], %s576
        %s578 = sand.u32 %s183, 1
        %s579 = smul.addr %s578, 8
        %s580 = scalar_lea.vmem [#allocation7], %s579
        // Predicated region
        $region57: #{tpu_custom_call.1} parent=47 // pred_check
          %p581 = pneg %p193
        $region58: #{tpu_custom_call.1} parent=47 // pred_check_branch
          %583 = sbr.rel (%p581) target = $region60
        $region59: #{tpu_custom_call.1} parent=47 // pred_region
          %s585 = ssub.s32 128, 128
          %586 = vsyncadd %s577, %s585
          %s587 = smul.addr %s23, 128
          %s588 = scalar_lea.hbm %s7, %s587
          %s590 = sshll.u32 %s580, 4
          %s591 = int_to_ptr.vmem [resolvable:$true] %s590
          %593 = dma.vmem_to_hbm [thread:$0]  %s591, 128, %s588, %s577
        $region60: #{tpu_custom_call.1} parent=47 // pred_fallthru
          _
      $region48: #{tpu_custom_call.1} parent=5 // pred_fallthru
        _
      %p594 = scmp.le.s32.totalorder 2, %s18
      // Predicated region
      $region61: #{tpu_custom_call.1} parent=5 // pred_check
        %p595 = pneg %p594
      $region62: #{tpu_custom_call.1} parent=5 // pred_check_branch
        %597 = sbr.rel (%p595) target = $region64
      $region63: #{tpu_custom_call.1} parent=5 // pred_region
        %s598 = ssub.s32 %s18, 2
        // Predicated region
        $region65: #{tpu_custom_call.1} parent=63 // pred_check
          %p599 = pneg %p199
        $region66: #{tpu_custom_call.1} parent=63 // pred_check_branch
          %601 = sbr.rel (%p599) target = $region68
        $region67: #{tpu_custom_call.1} parent=63 // pred_region
          %s602 = sand.u32 %s184, 1
          %s603 = scalar_lea.sflag [#allocation4], %s602
          %s604 = sand.u32 %s184, 1
          %s605 = smul.addr %s604, 8
          %s606 = scalar_lea.vmem [#allocation7], %s605
          %607 = dma.done %s603, 128
        $region68: #{tpu_custom_call.1} parent=63 // pred_fallthru
          _
      $region64: #{tpu_custom_call.1} parent=5 // pred_fallthru
        _
    $region6: #{tpu_custom_call.1} parent=1 // loop_footer
      %s22 = sadd.s32 1, %s18
    $region7: #{tpu_custom_call.1} parent=1 // loop_footer_branch
      %17 = sbr.rel target = $region3
    $region8: #{tpu_custom_call.1} parent=1 // loop_exit
      _
    %608 = vsyncpa [#allocation3], 1
    %s609 = scalar_lea.sflag [#allocation3], 1
    %610 = vsyncpa %s609, 1
    %611 = vsyncpa [#allocation6], 1
    %612 = vsyncpa [#allocation4], 1
    %s613 = scalar_lea.sflag [#allocation4], 1
    %614 = vsyncpa %s613, 1

</llo_original>
